<compile_context>
chip_gen: v6e
topology: v6e:2x2x1
jax: 0.10.0
libtpu: 0.0.40
codegen_flags: <defaults>
</compile_context>

<pallas_src>
import functools

import jax
import jax.numpy as jnp
from jax.experimental import pallas as pl
from jax.experimental.pallas import tpu as pltpu

_LANE = 128
_SUBLANE = 8


def _round_up(x, m):
    return (x + m - 1) // m * m


def _twolayer_kernel(x_ref, w1_ref, b1_ref, w2_ref, b2_ref, o_ref):
    # x:  [tm, D]     w1: [D, Hp]   b1: [1, Hp]
    # w2: [Hp, Cp]    b2: [1, Cp]   o:  [tm, Cp]   (Hp, Cp multiples of 128)
    x = x_ref[...]
    h = jnp.dot(x, w1_ref[...], preferred_element_type=jnp.float32) + b1_ref[...]
    h = jax.nn.sigmoid(h)  # f32 on the EUP slot (free relative to MXU/store)
    out = jnp.dot(h, w2_ref[...], preferred_element_type=jnp.float32) + b2_ref[...]
    o_ref[...] = out.astype(o_ref.dtype)  # lane-dense [tm, Cp] store


def prepare_params(w1, b1, w2, b2, dtype=jnp.float32):
    """One-time conversion of PyTorch-layout params.

    w1: [H, D], b1: [H], w2: [C, H], b2: [C]  ->  kernel layout
    (in, out) transposed, zero-padded so H and C are multiples of 128 lanes.
    Do this ONCE at init time, not per forward call.
    """
    H, D = w1.shape
    C, _ = w2.shape
    Hp = _round_up(H, _LANE)
    Cp = _round_up(C, _LANE)

    w1_t = jnp.zeros((D, Hp), dtype).at[:, :H].set(jnp.transpose(w1).astype(dtype))
    b1_r = jnp.zeros((1, Hp), dtype).at[:, :H].set(b1.astype(dtype).reshape(1, H))
    # Rows H..Hp-1 of w2_t are zero, so padded hidden lanes (sigmoid(0)=0.5)
    # contribute exactly 0 to the second matmul.
    w2_t = jnp.zeros((Hp, Cp), dtype).at[:H, :C].set(jnp.transpose(w2).astype(dtype))
    b2_r = jnp.zeros((1, Cp), dtype).at[:, :C].set(b2.astype(dtype).reshape(1, C))
    return (w1_t, b1_r, w2_t, b2_r)


@functools.partial(jax.jit, static_argnames=("num_classes", "block_rows"))
def twolayer_forward(x, params, *, num_classes, block_rows=512):
    """x: [B, ...] flattened to [B, D]; params from prepare_params()."""
    w1_t, b1_r, w2_t, b2_r = params
    B = x.shape[0]
    x2 = x.reshape(B, -1).astype(w1_t.dtype)
    D = x2.shape[1]
    Hp = w1_t.shape[1]
    Cp = w2_t.shape[1]

    # Batch tile: as large as block_rows (sublane-aligned), pad B up to a
    # multiple of the tile so the grid divides evenly.
    tm = min(block_rows, _round_up(B, _SUBLANE))
    Bp = _round_up(B, tm)
    if Bp != B:
        x2 = jnp.pad(x2, ((0, Bp - B), (0, 0)))
    grid = (Bp // tm,)

    flops = 2 * Bp * D * Hp + 2 * Bp * Hp * Cp
    bytes_accessed = 4 * (Bp * D + D * Hp + Hp + Hp * Cp + Cp + Bp * Cp)
    cost = pl.CostEstimate(
        flops=flops, transcendentals=Bp * Hp, bytes_accessed=bytes_accessed
    )

    out = pl.pallas_call(
        _twolayer_kernel,
        out_shape=jax.ShapeDtypeStruct((Bp, Cp), jnp.float32),
        grid_spec=pltpu.PrefetchScalarGridSpec(
            num_scalar_prefetch=0,
            grid=grid,
            in_specs=[
                pl.BlockSpec((tm, D), lambda i: (i, 0)),   # x tile, pipelined
                pl.BlockSpec((D, Hp), lambda i: (0, 0)),   # weights stay
                pl.BlockSpec((1, Hp), lambda i: (0, 0)),   # VMEM-resident
                pl.BlockSpec((Hp, Cp), lambda i: (0, 0)),  # across the grid
                pl.BlockSpec((1, Cp), lambda i: (0, 0)),
            ],
            out_specs=pl.BlockSpec((tm, Cp), lambda i: (i, 0)),  # lane-dense
        ),
        compiler_params=pltpu.CompilerParams(
            dimension_semantics=("parallel",),       # independent B tiles
            vmem_limit_bytes=32 * 1024 * 1024,       # safe on v5e/v6e/v7x
        ),
        cost_estimate=cost,
    )(x2, w1_t, b1_r, w2_t, b2_r)

    return out[:B, :num_classes]


if __name__ == "__main__":
    # Small shapes consistent with the module: input_dim=64, hidden=32, classes=16
    B, input_dim, hidden_size, num_classes = 8, 64, 32, 16

    key = jax.random.PRNGKey(0)
    kx, kw1, kb1, kw2, kb2 = jax.random.split(key, 5)

    x = jax.random.normal(kx, (B, input_dim), dtype=jnp.float32)

    # Deterministic PyTorch-style Linear params (weight: [out, in], bias: [out])
    lim1 = 1.0 / jnp.sqrt(input_dim)
    w1 = jax.random.uniform(kw1, (hidden_size, input_dim), minval=-lim1, maxval=lim1)
    b1 = jax.random.uniform(kb1, (hidden_size,), minval=-lim1, maxval=lim1)
    lim2 = 1.0 / jnp.sqrt(hidden_size)
    w2 = jax.random.uniform(kw2, (num_classes, hidden_size), minval=-lim2, maxval=lim2)
    b2 = jax.random.uniform(kb2, (num_classes,), minval=-lim2, maxval=lim2)

    # One-time parameter preparation (transpose + lane-pad + cast).
    params = prepare_params(w1, b1, w2, b2)

    out = twolayer_forward(x, params, num_classes=num_classes)
    jax.block_until_ready(out)

    # Reference check in plain JAX (matches PyTorch forward semantics).
    ref = jax.nn.sigmoid(x @ w1.T + b1) @ w2.T + b2
    assert out.shape == (B, num_classes)
    assert jnp.allclose(out, ref, atol=1e-5, rtol=1e-5)

    print("KERNEL_OK")
</pallas_src>

<mosaic_0001>
module attributes {stable_mosaic.version = 11 : i64} {
  func.func @_twolayer_kernel(%arg0: i32, %arg1: memref<8x64xf32, #tpu.memory_space<vmem>>, %arg2: memref<64x128xf32, #tpu.memory_space<vmem>>, %arg3: memref<1x128xf32, #tpu.memory_space<vmem>>, %arg4: memref<128x128xf32, #tpu.memory_space<vmem>>, %arg5: memref<1x128xf32, #tpu.memory_space<vmem>>, %arg6: memref<8x128xf32, #tpu.memory_space<vmem>>) attributes {dimension_semantics = [#tpu.dimension_semantics<parallel>], iteration_bounds = array<i64: 1>, scalar_prefetch = 0 : i64, scratch_operands = 0 : i64, tpu.core_type = #tpu.core_type<tc>, window_params = [{transform_indices = @transform_0, window_bounds = array<i64: 8, 64>}, {pipeline_mode = #tpu.pipeline_mode<synchronous>, transform_indices = @transform_1, window_bounds = array<i64: 64, 128>}, {pipeline_mode = #tpu.pipeline_mode<synchronous>, transform_indices = @transform_2, window_bounds = array<i64: 1, 128>}, {pipeline_mode = #tpu.pipeline_mode<synchronous>, transform_indices = @transform_3, window_bounds = array<i64: 128, 128>}, {pipeline_mode = #tpu.pipeline_mode<synchronous>, transform_indices = @transform_4, window_bounds = array<i64: 1, 128>}, {transform_indices = @transform_5, window_bounds = array<i64: 8, 128>}]} {
    %c0 = arith.constant 0 : index
    %c0_0 = arith.constant 0 : index
    %0 = vector.load %arg1[%c0, %c0_0] : memref<8x64xf32, #tpu.memory_space<vmem>>, vector<8x64xf32>
    %c0_1 = arith.constant 0 : index
    %c0_2 = arith.constant 0 : index
    %1 = vector.load %arg2[%c0_1, %c0_2] : memref<64x128xf32, #tpu.memory_space<vmem>>, vector<64x128xf32>
    %cst = arith.constant dense<0.000000e+00> : vector<8x128xf32>
    %2 = tpu.matmul %0, %1, %cst {dimension_numbers = #tpu.dot_dimension_numbers<[1], [0], [0], [1], [0, 0, 1, 1], [], []>} : vector<8x64xf32>, vector<64x128xf32>, vector<8x128xf32> -> vector<8x128xf32>
    %c0_3 = arith.constant 0 : index
    %c0_4 = arith.constant 0 : index
    %3 = vector.load %arg3[%c0_3, %c0_4] : memref<1x128xf32, #tpu.memory_space<vmem>>, vector<1x128xf32>
    %4 = vector.broadcast %3 : vector<1x128xf32> to vector<8x128xf32>
    %5 = arith.addf %2, %4 : vector<8x128xf32>
    %6 = arith.negf %5 : vector<8x128xf32>
    %7 = math.exp %6 : vector<8x128xf32>
    %cst_5 = arith.constant 1.000000e+00 : f32
    %8 = vector.broadcast %cst_5 : f32 to vector<8x128xf32>
    %9 = arith.addf %8, %7 : vector<8x128xf32>
    %10 = arith.divf %8, %9 : vector<8x128xf32>
    %c0_6 = arith.constant 0 : index
    %c0_7 = arith.constant 0 : index
    %11 = vector.load %arg4[%c0_6, %c0_7] : memref<128x128xf32, #tpu.memory_space<vmem>>, vector<128x128xf32>
    %cst_8 = arith.constant dense<0.000000e+00> : vector<8x128xf32>
    %12 = tpu.matmul %10, %11, %cst_8 {dimension_numbers = #tpu.dot_dimension_numbers<[1], [0], [0], [1], [0, 0, 1, 1], [], []>} : vector<8x128xf32>, vector<128x128xf32>, vector<8x128xf32> -> vector<8x128xf32>
    %c0_9 = arith.constant 0 : index
    %c0_10 = arith.constant 0 : index
    %13 = vector.load %arg5[%c0_9, %c0_10] : memref<1x128xf32, #tpu.memory_space<vmem>>, vector<1x128xf32>
    %14 = vector.broadcast %13 : vector<1x128xf32> to vector<8x128xf32>
    %15 = arith.addf %12, %14 : vector<8x128xf32>
    %c0_11 = arith.constant 0 : index
    %c0_12 = arith.constant 0 : index
    %16 = vector.load %arg6[%c0_11, %c0_12] : memref<8x128xf32, #tpu.memory_space<vmem>>, vector<8x128xf32>
    tpu.vector_store %arg6[%c0_11, %c0_12], %15 {strides = array<i32>} : memref<8x128xf32, #tpu.memory_space<vmem>>, vector<8x128xf32>,
    return
  }
  func.func @transform_0(%arg0: i32) -> (i32, i32) {
    %c0_i32 = arith.constant 0 : i32
    %c0_i32_0 = arith.constant 0 : i32
    return %arg0, %c0_i32 : i32, i32
  }
  func.func @transform_1(%arg0: i32) -> (i32, i32) {
    %c0_i32 = arith.constant 0 : i32
    %c0_i32_0 = arith.constant 0 : i32
    %c0_i32_1 = arith.constant 0 : i32
    return %c0_i32, %c0_i32_0 : i32, i32
  }
  func.func @transform_2(%arg0: i32) -> (i32, i32) {
    %c0_i32 = arith.constant 0 : i32
    %c0_i32_0 = arith.constant 0 : i32
    %c0_i32_1 = arith.constant 0 : i32
    return %c0_i32, %c0_i32_0 : i32, i32
  }
  func.func @transform_3(%arg0: i32) -> (i32, i32) {
    %c0_i32 = arith.constant 0 : i32
    %c0_i32_0 = arith.constant 0 : i32
    %c0_i32_1 = arith.constant 0 : i32
    return %c0_i32, %c0_i32_0 : i32, i32
  }
  func.func @transform_4(%arg0: i32) -> (i32, i32) {
    %c0_i32 = arith.constant 0 : i32
    %c0_i32_0 = arith.constant 0 : i32
    %c0_i32_1 = arith.constant 0 : i32
    return %c0_i32, %c0_i32_0 : i32, i32
  }
  func.func @transform_5(%arg0: i32) -> (i32, i32) {
    %c0_i32 = arith.constant 0 : i32
    %c0_i32_0 = arith.constant 0 : i32
    return %arg0, %c0_i32 : i32, i32
  }
}

</mosaic_0001>

<llo_original>
// kernel: twolayer_forward.1
$region0: #{twolayer_forward.1}
  #allocation0 [shape = 'u32[]', space=smem, size = 0x4, offset = 0x4, fixed_abs, tag = 'smem constant byte address 0x4 - core index']
  #allocation1 [shape = 'u32[144,128]{1,0:T(1,128)}', space=vmem, size = 0x12000, scoped, tag = 'internal scratch']
  %s0 = inlined_call_operand.hbm [shape: f32[8,64], index: 0, kind: input, shape index: {}]
  %s1 = inlined_call_operand.hbm [shape: f32[64,128], index: 1, kind: input, shape index: {}]
  %s2 = inlined_call_operand.vmem [shape: f32[1,128], index: 2, kind: input, shape index: {}]
  %s3 = inlined_call_operand.hbm [shape: f32[128,128], index: 3, kind: input, shape index: {}]
  %s4 = inlined_call_operand.vmem [shape: f32[1,128], index: 4, kind: input, shape index: {}]
  %s5 = inlined_call_operand.hbm [shape: f32[8,128], index: 5, kind: output, shape index: {}]
  %s6 = sld [smem:[#allocation0]]
  $region42: #{twolayer_forward.1} parent=0
    _
  %s8 = ssub.s32 1, %s6
  %s9 = scalar_select 0, %s8, %s6
  $region1: #{twolayer_forward.1} parent=0
    #allocation2 [shape = 'u8[4096]{0}', space=vmem, size = 0x1000, scoped, tag = 'input window, operand 0, single buffered']
    #allocation3 [shape = 's32[1]{0}', space=sflag, size = 0x4, scoped, tag = 'scoped memory for twolayer_forward.1']
    #allocation4 [shape = 's32[1]{0}', space=sflag, size = 0x4, scoped, tag = 'scoped memory for twolayer_forward.1']
    #allocation5 [shape = 'u8[32768]{0}', space=vmem, size = 0x8000, scoped, tag = 'input window, operand 1, single buffered']
    #allocation6 [shape = 's32[1]{0}', space=sflag, size = 0x4, scoped, tag = 'scoped memory for twolayer_forward.1']
    #allocation7 [shape = 'u8[65536]{0}', space=vmem, size = 0x10000, scoped, tag = 'input window, operand 3, single buffered']
    #allocation8 [shape = 'u8[4096]{0}', space=vmem, size = 0x1000, scoped, tag = 'output window, operand 0, single buffered']
    %10 = vsyncpa [#allocation3], 0
    %11 = vsyncpa [#allocation6], 0
    %12 = vsyncpa [#allocation4], 0
    // Predicated region
    $region2: #{twolayer_forward.1} parent=1 // pred_check
      _
    $region3: #{twolayer_forward.1} parent=1 // pred_check_branch
      %14 = sbr.rel (0) target = $region5
    $region4: #{twolayer_forward.1} parent=1 // pred_region
      %s16 = ssub.s32 128, 128
      %17 = vsyncadd [#allocation3], %s16
      %s19 = sshll.u32 [#allocation2], 4
      %s20 = int_to_ptr.vmem [resolvable:$true] %s19
      %22 = dma.hbm_to_vmem [thread:$0]  %s0, 128, %s20, [#allocation3]
    $region5: #{twolayer_forward.1} parent=1 // pred_fallthru
      _
    // Predicated region
    $region6: #{twolayer_forward.1} parent=1 // pred_check
      _
    $region7: #{twolayer_forward.1} parent=1 // pred_check_branch
      %24 = sbr.rel (0) target = $region9
    $region8: #{twolayer_forward.1} parent=1 // pred_region
      %s26 = ssub.s32 1024, 1024
      %27 = vsyncadd [#allocation6], %s26
      %s28 = sshll.u32 [#allocation5], 4
      %s29 = int_to_ptr.vmem [resolvable:$true] %s28
      %34 = dma.hbm_to_vmem [thread:$0]  %s1, 1024, %s29, [#allocation6], 128, 128, 8
    $region9: #{twolayer_forward.1} parent=1 // pred_fallthru
      _
    // Predicated region
    $region10: #{twolayer_forward.1} parent=1 // pred_check
      _
    $region11: #{twolayer_forward.1} parent=1 // pred_check_branch
      %36 = sbr.rel (0) target = $region13
    $region12: #{twolayer_forward.1} parent=1 // pred_region
      _
    $region13: #{twolayer_forward.1} parent=1 // pred_fallthru
      _
    // Predicated region
    $region14: #{twolayer_forward.1} parent=1 // pred_check
      _
    $region15: #{twolayer_forward.1} parent=1 // pred_check_branch
      %38 = sbr.rel (0) target = $region17
    $region16: #{twolayer_forward.1} parent=1 // pred_region
      %s40 = ssub.s32 2048, 2048
      %41 = vsyncadd [#allocation6], %s40
      %s42 = sshll.u32 [#allocation7], 4
      %s43 = int_to_ptr.vmem [resolvable:$true] %s42
      %48 = dma.hbm_to_vmem [thread:$0]  %s3, 2048, %s43, [#allocation6], 128, 128, 8
    $region17: #{twolayer_forward.1} parent=1 // pred_fallthru
      _
    // Predicated region
    $region18: #{twolayer_forward.1} parent=1 // pred_check
      _
    $region19: #{twolayer_forward.1} parent=1 // pred_check_branch
      %50 = sbr.rel (0) target = $region21
    $region20: #{twolayer_forward.1} parent=1 // pred_region
      _
    $region21: #{twolayer_forward.1} parent=1 // pred_fallthru
      _
    // Predicated region
    $region22: #{twolayer_forward.1} parent=1 // pred_check
      _
    $region23: #{twolayer_forward.1} parent=1 // pred_check_branch
      %52 = sbr.rel (0) target = $region25
    $region24: #{twolayer_forward.1} parent=1 // pred_region
      %53 = dma.done [#allocation3], 128
    $region25: #{twolayer_forward.1} parent=1 // pred_fallthru
      _
    // Predicated region
    $region26: #{twolayer_forward.1} parent=1 // pred_check
      _
    $region27: #{twolayer_forward.1} parent=1 // pred_check_branch
      %55 = sbr.rel (0) target = $region29
    $region28: #{twolayer_forward.1} parent=1 // pred_region
      %56 = dma.done [#allocation6], 1024
    $region29: #{twolayer_forward.1} parent=1 // pred_fallthru
      _
    // Predicated region
    $region30: #{twolayer_forward.1} parent=1 // pred_check
      _
    $region31: #{twolayer_forward.1} parent=1 // pred_check_branch
      %58 = sbr.rel (0) target = $region33
    $region32: #{twolayer_forward.1} parent=1 // pred_region
      %59 = dma.done [#allocation6], 2048
    $region33: #{twolayer_forward.1} parent=1 // pred_fallthru
      _
    %v60 = vld [vmem:[#allocation2] sm:$0xff]
    %v61 = vld [vmem:[#allocation5] sm:$0xff]
    %v62 = vld [vmem:[#allocation5 + $0x8] sm:$0xff]
    %v63 = vld [vmem:[#allocation5 + $0x10] sm:$0xff]
    %v64 = vld [vmem:[#allocation5 + $0x18] sm:$0xff]
    %v65 = vld [vmem:[#allocation5 + $0x20] sm:$0xff]
    %v66 = vld [vmem:[#allocation5 + $0x28] sm:$0xff]
    %v67 = vld [vmem:[#allocation5 + $0x30] sm:$0xff]
    %v68 = vld [vmem:[#allocation5 + $0x38] sm:$0xff]
    %v69 = vld [vmem:[%s2] sm:$0x1]
    %v71 = vlaneseq
    %v72 = vshrl.u32 %v71, 7
    %v73 = vsub.s32 0, %v72
    %v74 = vrot.slane %v69, %v73
    %vm76 = vcmask 523264
    %v78 = vsel %vm76, %v60, 0
    %80 = vmatprep.subr.mxu0 0.0
    %81 = vmatpush1.msra.mxu0 0.0
    %82 = vmatprep.subr.mxu0 0.0
    %83 = vmatpush1.msra.mxu0 0.0
    %84 = vmatprep.subr.mxu0 0.0
    %85 = vmatpush1.msra.mxu0 0.0
    %86 = vmatprep.subr.mxu0 0.0
    %87 = vmatpush1.msra.mxu0 0.0
    %88 = vmatprep.subr.mxu0 0.0
    %89 = vmatpush1.msra.mxu0 0.0
    %90 = vmatprep.subr.mxu0 0.0
    %91 = vmatpush1.msra.mxu0 0.0
    %92 = vmatprep.subr.mxu0 0.0
    %93 = vmatpush1.msra.mxu0 0.0
    %94 = vmatprep.subr.mxu0 0.0
    %95 = vmatpush1.msra.mxu0 0.0
    %96 = vmatprep.subr.mxu0 0.0
    %97 = vmatpush1.msra.mxu0 %v68
    %98 = vmatprep.subr.mxu0 0.0
    %99 = vmatpush1.msra.mxu0 %v67
    %100 = vmatprep.subr.mxu0 0.0
    %101 = vmatpush1.msra.mxu0 %v66
    %102 = vmatprep.subr.mxu0 0.0
    %103 = vmatpush1.msra.mxu0 %v65
    %104 = vmatprep.subr.mxu0 0.0
    %105 = vmatpush1.msra.mxu0 %v64
    %106 = vmatprep.subr.mxu0 0.0
    %107 = vmatpush1.msra.mxu0 %v63
    %108 = vmatprep.subr.mxu0 0.0
    %109 = vmatpush1.msra.mxu0 %v62
    %110 = vmatprep.subr.mxu0 0.0
    %111 = vmatpush1.msra.mxu0 %v61
    %112 = vmatprep.subr.mxu0 0.0
    %113 = vmatpush2.msra.mxu0 0.0
    %114 = vmatprep.subr.mxu0 0.0
    %115 = vmatpush2.msra.mxu0 0.0
    %116 = vmatprep.subr.mxu0 0.0
    %117 = vmatpush2.msra.mxu0 0.0
    %118 = vmatprep.subr.mxu0 0.0
    %119 = vmatpush2.msra.mxu0 0.0
    %120 = vmatprep.subr.mxu0 0.0
    %121 = vmatpush2.msra.mxu0 0.0
    %122 = vmatprep.subr.mxu0 0.0
    %123 = vmatpush2.msra.mxu0 0.0
    %124 = vmatprep.subr.mxu0 0.0
    %125 = vmatpush2.msra.mxu0 0.0
    %126 = vmatprep.subr.mxu0 0.0
    %127 = vmatpush2.msra.mxu0 0.0
    %128 = vmatprep.subr.mxu0 0.0
    %129 = vmatpush2.msra.mxu0 0.0
    %130 = vmatprep.subr.mxu0 0.0
    %131 = vmatpush2.msra.mxu0 0.0
    %132 = vmatprep.subr.mxu0 0.0
    %133 = vmatpush2.msra.mxu0 0.0
    %134 = vmatprep.subr.mxu0 0.0
    %135 = vmatpush2.msra.mxu0 0.0
    %136 = vmatprep.subr.mxu0 0.0
    %137 = vmatpush2.msra.mxu0 0.0
    %138 = vmatprep.subr.mxu0 0.0
    %139 = vmatpush2.msra.mxu0 0.0
    %140 = vmatprep.subr.mxu0 0.0
    %141 = vmatpush2.msra.mxu0 0.0
    %142 = vmatprep.subr.mxu0 0.0
    %143 = vmatpush2.msra.mxu0 0.0
    %144 = vmatprep.mubr.f32.mxu0 0.0
    %145 = vmatmul.mubr.f32.gmra.mxu0 %v78
    %v146 = vpop.f32.mrf.mxu0
    %v147 = vadd.f32 %v74, %v146
    %v148 = vpop.f32.mrf.mxu0
    %149 = vdwg.mxu0
    %v150 = vxor.u32 %v147, 2147483648
    %v151 = vmul.f32 %v150, 1.442695
    %v152 = vpow.pop %v151
    %v153 = vadd.f32 %v152, 1.0
    %v154 = vrcp.pop %v153
    %v155 = vmul.f32 1.0, %v154
    %v156 = vld [vmem:[#allocation7] sm:$0xff]
    %v157 = vld [vmem:[#allocation7 + $0x8] sm:$0xff]
    %v158 = vld [vmem:[#allocation7 + $0x10] sm:$0xff]
    %v159 = vld [vmem:[#allocation7 + $0x18] sm:$0xff]
    %v160 = vld [vmem:[#allocation7 + $0x20] sm:$0xff]
    %v161 = vld [vmem:[#allocation7 + $0x28] sm:$0xff]
    %v162 = vld [vmem:[#allocation7 + $0x30] sm:$0xff]
    %v163 = vld [vmem:[#allocation7 + $0x38] sm:$0xff]
    %v164 = vld [vmem:[#allocation7 + $0x40] sm:$0xff]
    %v165 = vld [vmem:[#allocation7 + $0x48] sm:$0xff]
    %v166 = vld [vmem:[#allocation7 + $0x50] sm:$0xff]
    %v167 = vld [vmem:[#allocation7 + $0x58] sm:$0xff]
    %v168 = vld [vmem:[#allocation7 + $0x60] sm:$0xff]
    %v169 = vld [vmem:[#allocation7 + $0x68] sm:$0xff]
    %v170 = vld [vmem:[#allocation7 + $0x70] sm:$0xff]
    %v171 = vld [vmem:[#allocation7 + $0x78] sm:$0xff]
    %v172 = vld [vmem:[%s4] sm:$0x1]
    %v174 = vlaneseq
    %v175 = vshrl.u32 %v174, 7
    %v176 = vsub.s32 0, %v175
    %v177 = vrot.slane %v172, %v176
    %179 = vmatprep.subr.mxu0 0.0
    %180 = vmatpush1.msra.mxu0 %v171
    %181 = vmatprep.subr.mxu0 0.0
    %182 = vmatpush1.msra.mxu0 %v170
    %183 = vmatprep.subr.mxu0 0.0
    %184 = vmatpush1.msra.mxu0 %v169
    %185 = vmatprep.subr.mxu0 0.0
    %186 = vmatpush1.msra.mxu0 %v168
    %187 = vmatprep.subr.mxu0 0.0
    %188 = vmatpush1.msra.mxu0 %v167
    %189 = vmatprep.subr.mxu0 0.0
    %190 = vmatpush1.msra.mxu0 %v166
    %191 = vmatprep.subr.mxu0 0.0
    %192 = vmatpush1.msra.mxu0 %v165
    %193 = vmatprep.subr.mxu0 0.0
    %194 = vmatpush1.msra.mxu0 %v164
    %195 = vmatprep.subr.mxu0 0.0
    %196 = vmatpush1.msra.mxu0 %v163
    %197 = vmatprep.subr.mxu0 0.0
    %198 = vmatpush1.msra.mxu0 %v162
    %199 = vmatprep.subr.mxu0 0.0
    %200 = vmatpush1.msra.mxu0 %v161
    %201 = vmatprep.subr.mxu0 0.0
    %202 = vmatpush1.msra.mxu0 %v160
    %203 = vmatprep.subr.mxu0 0.0
    %204 = vmatpush1.msra.mxu0 %v159
    %205 = vmatprep.subr.mxu0 0.0
    %206 = vmatpush1.msra.mxu0 %v158
    %207 = vmatprep.subr.mxu0 0.0
    %208 = vmatpush1.msra.mxu0 %v157
    %209 = vmatprep.subr.mxu0 0.0
    %210 = vmatpush1.msra.mxu0 %v156
    %211 = vmatprep.subr.mxu0 0.0
    %212 = vmatpush2.msra.mxu0 0.0
    %213 = vmatprep.subr.mxu0 0.0
    %214 = vmatpush2.msra.mxu0 0.0
    %215 = vmatprep.subr.mxu0 0.0
    %216 = vmatpush2.msra.mxu0 0.0
    %217 = vmatprep.subr.mxu0 0.0
    %218 = vmatpush2.msra.mxu0 0.0
    %219 = vmatprep.subr.mxu0 0.0
    %220 = vmatpush2.msra.mxu0 0.0
    %221 = vmatprep.subr.mxu0 0.0
    %222 = vmatpush2.msra.mxu0 0.0
    %223 = vmatprep.subr.mxu0 0.0
    %224 = vmatpush2.msra.mxu0 0.0
    %225 = vmatprep.subr.mxu0 0.0
    %226 = vmatpush2.msra.mxu0 0.0
    %227 = vmatprep.subr.mxu0 0.0
    %228 = vmatpush2.msra.mxu0 0.0
    %229 = vmatprep.subr.mxu0 0.0
    %230 = vmatpush2.msra.mxu0 0.0
    %231 = vmatprep.subr.mxu0 0.0
    %232 = vmatpush2.msra.mxu0 0.0
    %233 = vmatprep.subr.mxu0 0.0
    %234 = vmatpush2.msra.mxu0 0.0
    %235 = vmatprep.subr.mxu0 0.0
    %236 = vmatpush2.msra.mxu0 0.0
    %237 = vmatprep.subr.mxu0 0.0
    %238 = vmatpush2.msra.mxu0 0.0
    %239 = vmatprep.subr.mxu0 0.0
    %240 = vmatpush2.msra.mxu0 0.0
    %241 = vmatprep.subr.mxu0 0.0
    %242 = vmatpush2.msra.mxu0 0.0
    %243 = vmatprep.mubr.f32.mxu0 0.0
    %244 = vmatmul.mubr.f32.gmra.mxu0 %v155
    %v245 = vpop.f32.mrf.mxu0
    %v246 = vadd.f32 %v177, %v245
    %v247 = vpop.f32.mrf.mxu0
    %248 = vdwg.mxu0
    %249 = vst [vmem:[#allocation8] sm:$0xff] %v246
    // Predicated region
    $region34: #{twolayer_forward.1} parent=1 // pred_check
      _
    $region35: #{twolayer_forward.1} parent=1 // pred_check_branch
      %251 = sbr.rel (0) target = $region37
    $region36: #{twolayer_forward.1} parent=1 // pred_region
      %s253 = ssub.s32 128, 128
      %254 = vsyncadd [#allocation4], %s253
      %s256 = sshll.u32 [#allocation8], 4
      %s257 = int_to_ptr.vmem [resolvable:$true] %s256
      %259 = dma.vmem_to_hbm [thread:$0]  %s257, 128, %s5, [#allocation4]
    $region37: #{twolayer_forward.1} parent=1 // pred_fallthru
      _
    // Predicated region
    $region38: #{twolayer_forward.1} parent=1 // pred_check
      _
    $region39: #{twolayer_forward.1} parent=1 // pred_check_branch
      %261 = sbr.rel (0) target = $region41
    $region40: #{twolayer_forward.1} parent=1 // pred_region
      %262 = dma.done [#allocation4], 128
    $region41: #{twolayer_forward.1} parent=1 // pred_fallthru
      _
    %263 = vsyncpa [#allocation3], 1
    %264 = vsyncpa [#allocation6], 1
    %265 = vsyncpa [#allocation4], 1

</llo_original>
